<compile_context>
chip_gen: v6e
topology: v6e:2x2x1
jax: 0.10.0
libtpu: 0.0.40
codegen_flags: <defaults>
</compile_context>

<pallas_src>
import numpy as np
import jax
import jax.numpy as jnp
from jax import lax
from jax.experimental import pallas as pl
from jax.experimental.pallas import tpu as pltpu

# ---------------- static configuration ----------------
B = 2
IN_CH = 4
OUT_CH = 4
KSIZE = 3
STRIDE = 1
EXP = 8                  # exp_size
L = 36                   # sequence length
LG = L - 4               # GCU branch length (AvgPool3 + Conv3, no pad)
D_ATT = 16               # agca `d`
DIVIDE = 4
HID = EXP // DIVIDE      # 2
C2 = 2 * EXP             # 16
CD = EXP * D_ATT         # 128
EPS = 1e-5

assert STRIDE == 1 and IN_CH == OUT_CH     # residual branch of Block is exercised
assert LG % D_ATT == 0                     # AdaptiveAvgPool1d(d) is uniform pooling

# ---------------- weight-slab layout (row offsets, 16-row aligned for bf16) ----------------
WIDTH = B * CD           # 256 lanes


def _align(n, a=16):
    return (n + a - 1) // a * a


ROW_MGC = 0                                   # (3*B*C2, WIDTH) folded (Wgc @ Wgcu)^T
ROW_W1 = _align(ROW_MGC + 3 * B * C2)         # (B*HID, WIDTH)  SE W1 (block-diag), used NT
ROW_WEXP = _align(ROW_W1 + B * HID)           # (B*EXP, B*IN)   expand conv
ROW_RF = _align(ROW_WEXP + B * EXP)           # (KSIZE, L)      rfold^T length reduction
ROW_W2 = _align(ROW_RF + KSIZE)               # (B*HID, B*EXP)  SE W2^T
ROW_WPC = _align(ROW_W2 + B * HID)            # (B*OUT, B*EXP)  point conv
NW_ROWS = _align(ROW_WPC + B * OUT_CH)

ROW_CH = 0                                    # (B*EXP, 5): lane0 sh_exp, lanes1:4 dw taps, lane4 sh_dw
ROW_SHPC = 16                                 # (B*OUT, 1)
ROW_BU = 24                                   # (1, WIDTH) folded gc-conv bias
ROW_B1 = 25                                   # (1, B*HID)
ROW_B2 = 26                                   # (1, B*EXP)
NB_ROWS = 32


def _h_swish(z):
    return z * jnp.clip(z + 3.0, 0.0, 6.0) * (1.0 / 6.0)


# ---------------- shared math (used by the kernel AND the folded f32 reference) ----------------

def _block_compute(x, wexp, sh_exp, wdw, sh_dw, rft, mgcT, bu, w1, b1, w2t, b2,
                   wpc, shpc, *, cast_dt, prec):
    f32 = jnp.float32

    def mm(a, b):            # plain matmul, operands cast for the MXU
        return jnp.dot(a.astype(cast_dt), b.astype(cast_dt),
                       preferred_element_type=f32, precision=prec)

    def mm_nt(a, b):         # contract last dim of both (A @ B^T)
        return lax.dot_general(a.astype(cast_dt), b.astype(cast_dt),
                               (((1,), (1,)), ((), ())),
                               preferred_element_type=f32, precision=prec)

    # ---- Block.conv: 1x1 expand conv (BN folded) + h_swish ----
    h = _h_swish(mm(wexp, x) + sh_exp)                               # (B*EXP, L)

    # ---- Block.depth_conv: dw conv k=3 pad=1 (+bias/BN folded) ----
    # zero-padded +/-1 neighbour shifts via lane concat (XLU lane shifts, no MXU)
    zcol = jnp.zeros((h.shape[0], 1), f32)
    h_m1 = jnp.concatenate([zcol, h[:, :L - 1]], axis=1)             # h[:, l-1]
    h_p1 = jnp.concatenate([h[:, 1:], zcol], axis=1)                 # h[:, l+1]
    v = (wdw[:, 0:1] * h_m1 + wdw[:, 1:2] * h + wdw[:, 2:3] * h_p1
         + sh_dw)                                                    # (B*EXP, L)

    # ---- agca / GCU ----
    # TODO(synk): gcu() is undefined in the reference source; assumed split
    #             gcu(x) = (x*sin(x), x*cos(x)).
    yi = v * jnp.sin(v)
    yr = v * jnp.cos(v)
    # batch-folded y1 rows: [yi_b0, yr_b0, yi_b1, yr_b1]; the y2 channel
    # permutation of the second branch is folded into the weights on the host.
    y1 = jnp.concatenate([yi[0:EXP], yr[0:EXP], yi[EXP:], yr[EXP:]], axis=0)   # (B*C2, L)

    # whole pooling path (AvgPool3 + conv taps + AdaptiveAvgPool(d) + Linear(d,1))
    # reduced to a single (3, L) x (B*C2, L)^T contraction
    qt = mm_nt(rft, y1)                                              # (KSIZE, B*C2)
    qrow = jnp.concatenate([qt[0:1], qt[1:2], qt[2:3]], axis=1)      # (1, 3*B*C2) lane-major

    # lane-major SE / attention chain (grouped 1x1 conv folded with the branch convs)
    u = jnp.maximum(mm(qrow, mgcT) + bu, 0.0)                        # (1, B*CD)
    t1 = jnp.maximum(mm_nt(u, w1) + b1, 0.0)                         # (1, B*HID)
    t2 = mm(t1, w2t) + b2                                            # (1, B*EXP)
    gate = jnp.clip(t2 + 3.0, 0.0, 6.0) * (1.0 / 6.0)                # h_sigmoid, (1, B*EXP)

    # gate folded into the point-conv weight: pc = (Wpc * gate) @ v  (+bias/BN folded)
    pc = mm(wpc * gate, v) + shpc                                    # (B*OUT, L)
    return _h_swish(pc) + x


# ---------------- the fused kernel ----------------

def _block_kernel(x_ref, w_ref, b_ref, o_ref):
    x = x_ref[...]

    # static slices of the two slabs (single DMA each)
    mgcT = w_ref[ROW_MGC:ROW_MGC + 3 * B * C2, :]
    w1 = w_ref[ROW_W1:ROW_W1 + B * HID, :]
    wexp = w_ref[ROW_WEXP:ROW_WEXP + B * EXP, 0:B * IN_CH]
    rft = w_ref[ROW_RF:ROW_RF + KSIZE, 0:L]
    w2t = w_ref[ROW_W2:ROW_W2 + B * HID, 0:B * EXP]
    wpc = w_ref[ROW_WPC:ROW_WPC + B * OUT_CH, 0:B * EXP]

    chan = b_ref[ROW_CH:ROW_CH + B * EXP, 0:5]
    sh_exp = chan[:, 0:1]
    wdw = chan[:, 1:4]
    sh_dw = chan[:, 4:5]
    shpc = b_ref[ROW_SHPC:ROW_SHPC + B * OUT_CH, 0:1]
    bu = b_ref[ROW_BU:ROW_BU + 1, :]
    b1 = b_ref[ROW_B1:ROW_B1 + 1, 0:B * HID]
    b2 = b_ref[ROW_B2:ROW_B2 + 1, 0:B * EXP]

    o_ref[...] = _block_compute(x, wexp, sh_exp, wdw, sh_dw, rft, mgcT, bu, w1,
                                b1, w2t, b2, wpc, shpc,
                                cast_dt=jnp.bfloat16, prec=None)


@jax.jit
def block_forward(x, wslab, bslab):
    xf = x.reshape(B * IN_CH, L)
    out = pl.pallas_call(
        _block_kernel,
        out_shape=jax.ShapeDtypeStruct((B * OUT_CH, L), jnp.float32),
        grid=(1,),
        in_specs=[pl.BlockSpec(xf.shape, lambda i: (0, 0)),
                  pl.BlockSpec(wslab.shape, lambda i: (0, 0)),
                  pl.BlockSpec(bslab.shape, lambda i: (0, 0))],
        out_specs=pl.BlockSpec((B * OUT_CH, L), lambda i: (0, 0)),
        compiler_params=pltpu.CompilerParams(dimension_semantics=("arbitrary",)),
    )(xf, wslab, bslab)
    return out.reshape(B, OUT_CH, L)


# ---------------- parameter construction (torch-like random weights) ----------------

def _grouped_dense(w, groups):
    # torch grouped weight (Cout, Cin/groups, K) -> dense (K, Cout, Cin_total)
    w = np.asarray(w, np.float32)
    cout, cing, k = w.shape
    dense = np.zeros((k, cout, cing * groups), np.float32)
    opg = cout // groups
    for o in range(cout):
        g = o // opg
        dense[:, o, g * cing:(g + 1) * cing] = w[o].T
    return dense


def make_params(key):
    keys = iter(jax.random.split(key, 64))

    def nrm(shape, s=0.3):
        return np.asarray(s * jax.random.normal(next(keys), shape, dtype=jnp.float32))

    def bn(c):
        gamma = np.asarray(1.0 + 0.1 * jax.random.normal(next(keys), (c,), dtype=jnp.float32))
        beta = np.asarray(0.1 * jax.random.normal(next(keys), (c,), dtype=jnp.float32))
        mean = np.asarray(0.1 * jax.random.normal(next(keys), (c,), dtype=jnp.float32))
        var = np.asarray(jax.random.uniform(next(keys), (c,), jnp.float32, 0.5, 1.5))
        scale = (gamma / np.sqrt(var + EPS)).astype(np.float32)
        shift = (beta - mean * scale).astype(np.float32)
        return scale, shift

    R = {}
    R['w_exp'] = nrm((EXP, IN_CH)); R['s_exp'], R['sh_exp'] = bn(EXP)
    R['w_dw'] = nrm((EXP, KSIZE)); R['b_dw'] = nrm((EXP,), 0.1)
    R['s_dw'], R['sh_dw'] = bn(EXP)
    for name, groups in (('gc1', 2), ('gc2', EXP)):
        cing = C2 // groups
        R[name + '_s1'], R[name + '_b1'] = bn(C2)
        R[name + '_w'] = nrm((C2, cing, KSIZE))
        R[name + '_bias'] = nrm((C2,), 0.1)
        R[name + '_s2'], R[name + '_b2'] = bn(C2)
        R[name + '_dense'] = _grouped_dense(R[name + '_w'], groups)
    R['w_lin'] = nrm((D_ATT,)); R['b_lin'] = nrm((1,), 0.1)
    R['w_gc'] = nrm((CD, EXP, 1)); R['b_gc'] = nrm((CD,), 0.1)
    R['gc_dense'] = _grouped_dense(R['w_gc'], 4)[0]            # (CD, 4*EXP)
    R['W1'] = nrm((HID, CD), 0.1); R['b1'] = nrm((HID,), 0.1)
    R['W2'] = nrm((EXP, HID)); R['b2'] = nrm((EXP,), 0.1)
    R['w_pc'] = nrm((OUT_CH, EXP)); R['b_pc'] = nrm((OUT_CH,), 0.1)
    R['s_pc'], R['sh_pc'] = bn(OUT_CH)
    return R


# ---------------- host-side folding (float64) + slab packing ----------------

def fold_params(R):
    f8 = np.float64
    eyeB = np.eye(B, dtype=f8)

    def tile_col(v):
        return np.tile(np.asarray(v, f8), B).reshape(-1, 1)

    # expand conv (BN scale into weight, block-diag over batch)
    w_exp_bd = np.kron(eyeB, np.asarray(R['s_exp'], f8)[:, None] * np.asarray(R['w_exp'], f8))
    sh_exp = tile_col(R['sh_exp'])

    # depthwise conv (BN scale into taps, bias+shift folded)
    w_dw = np.tile(np.asarray(R['s_dw'], f8)[:, None] * np.asarray(R['w_dw'], f8), (B, 1))
    sh_dw = tile_col(np.asarray(R['s_dw'], f8) * np.asarray(R['b_dw'], f8)
                     + np.asarray(R['sh_dw'], f8))

    # GCU: y2 is a per-batch row permutation of y1 -> fold perm into conv2 weights
    perm = np.empty(C2, np.int64)
    perm[0::2] = np.arange(EXP)
    perm[1::2] = EXP + np.arange(EXP)
    iperm = np.argsort(perm)

    def fold_branch(name, row_perm):
        dense = np.asarray(R[name + '_dense'], f8)       # (K, C2, C2), branch-input order
        s_in, b_in = np.asarray(R[name + '_s1'], f8), np.asarray(R[name + '_b1'], f8)
        s_out, b_out = np.asarray(R[name + '_s2'], f8), np.asarray(R[name + '_b2'], f8)
        bias = np.asarray(R[name + '_bias'], f8)
        shift = s_out * (bias + np.einsum('koc,c->o', dense, b_in)) + b_out
        wt = dense[:, :, row_perm] * s_in[row_perm][None, None, :] * s_out[None, :, None]
        return wt, shift

    wt1, shift1 = fold_branch('gc1', np.arange(C2))
    wt2, shift2 = fold_branch('gc2', iperm)

    # both grouped convs, both batches: one (2*B*C2, 3*B*C2) map on (tap j, y1-row r)
    w_gcu = np.zeros((2 * B * C2, KSIZE * B * C2), f8)
    for br, wt in enumerate((wt1, wt2)):
        for b in range(B):
            ro = br * B * C2 + b * C2
            for j in range(KSIZE):
                co = j * B * C2 + b * C2
                w_gcu[ro:ro + C2, co:co + C2] = wt[j]
    sh_gcu = np.concatenate([np.tile(shift1, B), np.tile(shift2, B)])

    # AdaptiveAvgPool1d(d)+Linear(d,1) per-length weights; fold AvgPool3 + conv taps into
    # rfold (L, 3):  Q[r, j] = sum_l rfold[l, j] * y1[r, l]
    window = LG // D_ATT
    wlen = np.repeat(np.asarray(R['w_lin'], f8) / window, window)          # (LG,)
    rfold = np.zeros((L, KSIZE), f8)
    for j in range(KSIZE):
        for t in range(LG):
            for m in range(KSIZE):
                rfold[t + j + m, j] += wlen[t] / 3.0
    s_wlen = float(wlen.sum())

    # grouped 1x1 conv (4C -> C*d), block-diag over batch; fold the whole zv stage into it
    dense_gc = np.asarray(R['gc_dense'], f8)                               # (CD, 2*C2)
    w_gc_bd = np.zeros((B * CD, 2 * B * C2), f8)
    for b in range(B):
        w_gc_bd[b * CD:(b + 1) * CD, b * C2:(b + 1) * C2] = dense_gc[:, 0:C2]
        w_gc_bd[b * CD:(b + 1) * CD, B * C2 + b * C2:B * C2 + (b + 1) * C2] = dense_gc[:, C2:]
    b_gc = tile_col(np.asarray(R['b_gc'], f8) + float(R['b_lin'][0]) * dense_gc.sum(axis=1))
    m_gc = w_gc_bd @ w_gcu                                                 # (B*CD, 3*B*C2)
    bu = (w_gc_bd @ (sh_gcu * s_wlen)).reshape(-1, 1) + b_gc               # (B*CD, 1)

    # SE MLP (block-diag over batch)
    w1_bd = np.kron(eyeB, np.asarray(R['W1'], f8))                         # (B*HID, B*CD)
    b1 = np.tile(np.asarray(R['b1'], f8), B)
    w2_bd = np.kron(eyeB, np.asarray(R['W2'], f8))                         # (B*EXP, B*HID)
    b2 = np.tile(np.asarray(R['b2'], f8), B)

    # point conv (+BN folded)
    w_pc_bd = np.kron(eyeB, np.asarray(R['s_pc'], f8)[:, None] * np.asarray(R['w_pc'], f8))
    sh_pc = tile_col(np.asarray(R['s_pc'], f8) * np.asarray(R['b_pc'], f8)
                     + np.asarray(R['sh_pc'], f8))

    # f32 pieces for the folded (pure-JAX) reference
    P = dict(wexp=w_exp_bd, sh_exp=sh_exp, wdw=w_dw, sh_dw=sh_dw, rft=rfold.T,
             mgcT=m_gc.T, bu=bu.T, w1=w1_bd, b1=b1.reshape(1, -1),
             w2t=w2_bd.T, b2=b2.reshape(1, -1), wpc=w_pc_bd, shpc=sh_pc)
    P = {k: jnp.asarray(v, jnp.float32) for k, v in P.items()}

    # ---- pack into two slabs: bf16 dot-operand slab + f32 bias/tap slab ----
    wslab = np.zeros((NW_ROWS, WIDTH), np.float32)
    wslab[ROW_MGC:ROW_MGC + 3 * B * C2, :] = m_gc.T
    wslab[ROW_W1:ROW_W1 + B * HID, :] = w1_bd
    wslab[ROW_WEXP:ROW_WEXP + B * EXP, 0:B * IN_CH] = w_exp_bd
    wslab[ROW_RF:ROW_RF + KSIZE, 0:L] = rfold.T
    wslab[ROW_W2:ROW_W2 + B * HID, 0:B * EXP] = w2_bd.T
    wslab[ROW_WPC:ROW_WPC + B * OUT_CH, 0:B * EXP] = w_pc_bd

    bslab = np.zeros((NB_ROWS, WIDTH), np.float32)
    bslab[ROW_CH:ROW_CH + B * EXP, 0] = sh_exp[:, 0]
    bslab[ROW_CH:ROW_CH + B * EXP, 1:4] = w_dw
    bslab[ROW_CH:ROW_CH + B * EXP, 4] = sh_dw[:, 0]
    bslab[ROW_SHPC:ROW_SHPC + B * OUT_CH, 0] = sh_pc[:, 0]
    bslab[ROW_BU, :] = bu[:, 0]
    bslab[ROW_B1, 0:B * HID] = b1
    bslab[ROW_B2, 0:B * EXP] = b2

    return jnp.asarray(wslab, jnp.bfloat16), jnp.asarray(bslab, jnp.float32), P


def folded_reference(x, P):
    """Same math/fold as the kernel, plain JAX, f32 HIGHEST precision."""
    xf = x.reshape(B * IN_CH, L)
    y = _block_compute(xf, P['wexp'], P['sh_exp'], P['wdw'], P['sh_dw'], P['rft'],
                       P['mgcT'], P['bu'], P['w1'], P['b1'], P['w2t'], P['b2'],
                       P['wpc'], P['shpc'],
                       cast_dt=jnp.float32, prec=lax.Precision.HIGHEST)
    return y.reshape(B, OUT_CH, L)


# ---------------- pure-JAX reference of the ORIGINAL op graph ----------------

def reference_forward(x, R):
    HI = lax.Precision.HIGHEST

    def bn(t, s, b):
        return t * jnp.asarray(s)[None, :, None] + jnp.asarray(b)[None, :, None]

    def hsw(t):
        return t * jnp.clip(t + 3.0, 0.0, 6.0) / 6.0

    h = jnp.einsum('oc,bcl->bol', jnp.asarray(R['w_exp']), x, precision=HI)
    h = hsw(bn(h, R['s_exp'], R['sh_exp']))

    hp = jnp.pad(h, ((0, 0), (0, 0), (1, 1)))
    w_dw = jnp.asarray(R['w_dw'])
    v = sum(w_dw[:, j][None, :, None] * hp[:, :, j:j + L] for j in range(KSIZE))
    v = bn(v + jnp.asarray(R['b_dw'])[None, :, None], R['s_dw'], R['sh_dw'])

    yi = v * jnp.sin(v)
    yr = v * jnp.cos(v)
    y1 = jnp.concatenate([yi, yr], axis=1)
    y2 = jnp.concatenate([yi, yr], axis=-1).reshape(B, C2, L)

    def gcu_branch(y, name):
        t = bn(y, R[name + '_s1'], R[name + '_b1'])
        p = (t[:, :, 0:L - 2] + t[:, :, 1:L - 1] + t[:, :, 2:L]) / 3.0
        dense = jnp.asarray(R[name + '_dense'])
        c = sum(jnp.einsum('oc,bcl->bol', dense[j], p[:, :, j:j + LG], precision=HI)
                for j in range(KSIZE))
        return bn(c + jnp.asarray(R[name + '_bias'])[None, :, None],
                  R[name + '_s2'], R[name + '_b2'])

    y4 = jnp.concatenate([gcu_branch(y1, 'gc1'), gcu_branch(y2, 'gc2')], axis=1)

    pooled = y4.reshape(B, 4 * EXP, D_ATT, LG // D_ATT).mean(axis=-1)
    z = jnp.einsum('bcd,d->bc', pooled, jnp.asarray(R['w_lin']), precision=HI) + R['b_lin'][0]
    u = jax.nn.relu(jnp.einsum('oc,bc->bo', jnp.asarray(R['gc_dense']), z, precision=HI)
                    + jnp.asarray(R['b_gc'])[None, :])
    t1 = jax.nn.relu(jnp.einsum('hc,bc->bh', jnp.asarray(R['W1']), u, precision=HI)
                     + jnp.asarray(R['b1'])[None, :])
    t2 = jnp.einsum('oh,bh->bo', jnp.asarray(R['W2']), t1, precision=HI) \
        + jnp.asarray(R['b2'])[None, :]
    gate = jnp.clip(t2 + 3.0, 0.0, 6.0) / 6.0
    q = gate[:, :, None] * v

    pc = jnp.einsum('oc,bcl->bol', jnp.asarray(R['w_pc']), q, precision=HI) \
        + jnp.asarray(R['b_pc'])[None, :, None]
    return x + hsw(bn(pc, R['s_pc'], R['sh_pc']))


# ---------------- main ----------------

if __name__ == "__main__":
    key = jax.random.PRNGKey(0)
    kx, kp = jax.random.split(key)
    x = jax.random.normal(kx, (B, IN_CH, L), dtype=jnp.float32)

    R = make_params(kp)
    wslab, bslab, P = fold_params(R)

    y = block_forward(x, wslab, bslab)
    y = jax.block_until_ready(y)
    assert y.shape == (B, OUT_CH, L), y.shape
    assert bool(jnp.all(jnp.isfinite(y)))

    y_graph = reference_forward(x, R)       # original op graph, f32 HIGHEST
    y_fold = folded_reference(x, P)         # folded params, same math as kernel, f32 HIGHEST

    # tight check: host folding / reassociation is exact up to f32 roundoff
    err_fold = float(jnp.max(jnp.abs(y_fold - y_graph)))
    assert err_fold < 1e-3, f"folded-parameter reference mismatch: {err_fold}"

    # kernel check: bf16 MXU operands => looser tolerance
    err_kernel = float(jnp.max(jnp.abs(y - y_graph)))
    assert err_kernel < 1e-1, f"kernel mismatch vs reference: {err_kernel}"

    print("KERNEL_OK")
</pallas_src>

<mosaic_0001>
module attributes {stable_mosaic.version = 11 : i64} {
  func.func @_block_kernel(%arg0: i32, %arg1: memref<8x36xf32, #tpu.memory_space<vmem>>, %arg2: memref<176x256xbf16, #tpu.memory_space<vmem>>, %arg3: memref<32x256xf32, #tpu.memory_space<vmem>>, %arg4: memref<8x36xf32, #tpu.memory_space<vmem>>) attributes {dimension_semantics = [#tpu.dimension_semantics<arbitrary>], iteration_bounds = array<i64: 1>, scalar_prefetch = 0 : i64, scratch_operands = 0 : i64, tpu.core_type = #tpu.core_type<tc>, window_params = [{pipeline_mode = #tpu.pipeline_mode<synchronous>, transform_indices = @transform_0, window_bounds = array<i64: 8, 36>}, {pipeline_mode = #tpu.pipeline_mode<synchronous>, transform_indices = @transform_1, window_bounds = array<i64: 176, 256>}, {pipeline_mode = #tpu.pipeline_mode<synchronous>, transform_indices = @transform_2, window_bounds = array<i64: 32, 256>}, {pipeline_mode = #tpu.pipeline_mode<synchronous>, transform_indices = @transform_3, window_bounds = array<i64: 8, 36>}]} {
    %c0 = arith.constant 0 : index
    %c0_0 = arith.constant 0 : index
    %0 = vector.load %arg1[%c0, %c0_0] : memref<8x36xf32, #tpu.memory_space<vmem>>, vector<8x36xf32>
    %c0_1 = arith.constant 0 : index
    %c0_2 = arith.constant 0 : index
    %1 = vector.load %arg2[%c0_1, %c0_2] : memref<176x256xbf16, #tpu.memory_space<vmem>>, vector<96x256xbf16>
    %c96 = arith.constant 96 : index
    %c0_3 = arith.constant 0 : index
    %2 = vector.load %arg2[%c96, %c0_3] : memref<176x256xbf16, #tpu.memory_space<vmem>>, vector<4x256xbf16>
    %c112 = arith.constant 112 : index
    %c0_4 = arith.constant 0 : index
    %3 = vector.load %arg2[%c112, %c0_4] : memref<176x256xbf16, #tpu.memory_space<vmem>>, vector<16x8xbf16>
    %c128 = arith.constant 128 : index
    %c0_5 = arith.constant 0 : index
    %4 = vector.load %arg2[%c128, %c0_5] : memref<176x256xbf16, #tpu.memory_space<vmem>>, vector<3x36xbf16>
    %c144 = arith.constant 144 : index
    %c0_6 = arith.constant 0 : index
    %5 = vector.load %arg2[%c144, %c0_6] : memref<176x256xbf16, #tpu.memory_space<vmem>>, vector<4x16xbf16>
    %c160 = arith.constant 160 : index
    %c0_7 = arith.constant 0 : index
    %6 = vector.load %arg2[%c160, %c0_7] : memref<176x256xbf16, #tpu.memory_space<vmem>>, vector<8x16xbf16>
    %c0_8 = arith.constant 0 : index
    %c0_9 = arith.constant 0 : index
    %7 = vector.load %arg3[%c0_8, %c0_9] : memref<32x256xf32, #tpu.memory_space<vmem>>, vector<16x5xf32>
    %8 = vector.extract_strided_slice %7 {offsets = [0, 0], sizes = [16, 1], strides = [1, 1]} : vector<16x5xf32> to vector<16x1xf32>
    %9 = vector.extract_strided_slice %7 {offsets = [0, 1], sizes = [16, 3], strides = [1, 1]} : vector<16x5xf32> to vector<16x3xf32>
    %10 = vector.extract_strided_slice %7 {offsets = [0, 4], sizes = [16, 1], strides = [1, 1]} : vector<16x5xf32> to vector<16x1xf32>
    %c16 = arith.constant 16 : index
    %c0_10 = arith.constant 0 : index
    %11 = vector.load %arg3[%c16, %c0_10] : memref<32x256xf32, #tpu.memory_space<vmem>>, vector<8x1xf32>
    %c24 = arith.constant 24 : index
    %c0_11 = arith.constant 0 : index
    %12 = vector.load %arg3[%c24, %c0_11] : memref<32x256xf32, #tpu.memory_space<vmem>>, vector<1x256xf32>
    %c25 = arith.constant 25 : index
    %c0_12 = arith.constant 0 : index
    %13 = vector.load %arg3[%c25, %c0_12] : memref<32x256xf32, #tpu.memory_space<vmem>>, vector<1x4xf32>
    %c26 = arith.constant 26 : index
    %c0_13 = arith.constant 0 : index
    %14 = vector.load %arg3[%c26, %c0_13] : memref<32x256xf32, #tpu.memory_space<vmem>>, vector<1x16xf32>
    %15 = arith.truncf %0 : vector<8x36xf32> to vector<8x36xbf16>
    %cst = arith.constant dense<0.000000e+00> : vector<16x36xf32>
    %16 = tpu.matmul %3, %15, %cst {dimension_numbers = #tpu.dot_dimension_numbers<[1], [0], [0], [1], [0, 0, 1, 1], [], []>} : vector<16x8xbf16>, vector<8x36xbf16>, vector<16x36xf32> -> vector<16x36xf32>
    %17 = vector.broadcast %8 : vector<16x1xf32> to vector<16x36xf32>
    %18 = arith.addf %16, %17 : vector<16x36xf32>
    %cst_14 = arith.constant 3.000000e+00 : f32
    %19 = vector.broadcast %cst_14 : f32 to vector<16x36xf32>
    %20 = arith.addf %18, %19 : vector<16x36xf32>
    %cst_15 = arith.constant 0.000000e+00 : f32
    %cst_16 = arith.constant 6.000000e+00 : f32
    %21 = vector.broadcast %cst_15 : f32 to vector<16x36xf32>
    %22 = arith.maximumf %21, %20 : vector<16x36xf32>
    %23 = vector.broadcast %cst_16 : f32 to vector<16x36xf32>
    %24 = arith.minimumf %23, %22 : vector<16x36xf32>
    %25 = arith.mulf %18, %24 : vector<16x36xf32>
    %cst_17 = arith.constant 0.166666672 : f32
    %26 = vector.broadcast %cst_17 : f32 to vector<16x36xf32>
    %27 = arith.mulf %25, %26 : vector<16x36xf32>
    %cst_18 = arith.constant 0.000000e+00 : f32
    %28 = vector.broadcast %cst_18 : f32 to vector<16x1xf32>
    %29 = vector.extract_strided_slice %27 {offsets = [0, 0], sizes = [16, 35], strides = [1, 1]} : vector<16x36xf32> to vector<16x35xf32>
    %30 = tpu.concatenate %28, %29 in 1 : vector<16x1xf32>, vector<16x35xf32> -> vector<16x36xf32>
    %31 = vector.extract_strided_slice %27 {offsets = [0, 1], sizes = [16, 35], strides = [1, 1]} : vector<16x36xf32> to vector<16x35xf32>
    %32 = tpu.concatenate %31, %28 in 1 : vector<16x35xf32>, vector<16x1xf32> -> vector<16x36xf32>
    %33 = vector.extract_strided_slice %9 {offsets = [0, 0], sizes = [16, 1], strides = [1, 1]} : vector<16x3xf32> to vector<16x1xf32>
    %34 = vector.broadcast %33 : vector<16x1xf32> to vector<16x36xf32>
    %35 = arith.mulf %34, %30 : vector<16x36xf32>
    %36 = vector.extract_strided_slice %9 {offsets = [0, 1], sizes = [16, 1], strides = [1, 1]} : vector<16x3xf32> to vector<16x1xf32>
    %37 = vector.broadcast %36 : vector<16x1xf32> to vector<16x36xf32>
    %38 = arith.mulf %37, %27 : vector<16x36xf32>
    %39 = arith.addf %35, %38 : vector<16x36xf32>
    %40 = vector.extract_strided_slice %9 {offsets = [0, 2], sizes = [16, 1], strides = [1, 1]} : vector<16x3xf32> to vector<16x1xf32>
    %41 = vector.broadcast %40 : vector<16x1xf32> to vector<16x36xf32>
    %42 = arith.mulf %41, %32 : vector<16x36xf32>
    %43 = arith.addf %39, %42 : vector<16x36xf32>
    %44 = vector.broadcast %10 : vector<16x1xf32> to vector<16x36xf32>
    %45 = arith.addf %43, %44 : vector<16x36xf32>
    %46 = math.sin %45 : vector<16x36xf32>
    %47 = arith.mulf %45, %46 : vector<16x36xf32>
    %48 = math.cos %45 : vector<16x36xf32>
    %49 = arith.mulf %45, %48 : vector<16x36xf32>
    %50 = vector.extract_strided_slice %47 {offsets = [0, 0], sizes = [8, 36], strides = [1, 1]} : vector<16x36xf32> to vector<8x36xf32>
    %51 = vector.extract_strided_slice %49 {offsets = [0, 0], sizes = [8, 36], strides = [1, 1]} : vector<16x36xf32> to vector<8x36xf32>
    %52 = vector.extract_strided_slice %47 {offsets = [8, 0], sizes = [8, 36], strides = [1, 1]} : vector<16x36xf32> to vector<8x36xf32>
    %53 = vector.extract_strided_slice %49 {offsets = [8, 0], sizes = [8, 36], strides = [1, 1]} : vector<16x36xf32> to vector<8x36xf32>
    %54 = tpu.concatenate %50, %51, %52, %53 in 0 : vector<8x36xf32>, vector<8x36xf32>, vector<8x36xf32>, vector<8x36xf32> -> vector<32x36xf32>
    %55 = arith.truncf %54 : vector<32x36xf32> to vector<32x36xbf16>
    %cst_19 = arith.constant dense<0.000000e+00> : vector<3x32xf32>
    %56 = tpu.matmul %4, %55, %cst_19 {dimension_numbers = #tpu.dot_dimension_numbers<[1], [1], [0], [0], [0, 0, 1, 0], [], []>} : vector<3x36xbf16>, vector<32x36xbf16>, vector<3x32xf32> -> vector<3x32xf32>
    %57 = vector.extract_strided_slice %56 {offsets = [0, 0], sizes = [1, 32], strides = [1, 1]} : vector<3x32xf32> to vector<1x32xf32>
    %58 = vector.extract_strided_slice %56 {offsets = [1, 0], sizes = [1, 32], strides = [1, 1]} : vector<3x32xf32> to vector<1x32xf32>
    %59 = vector.extract_strided_slice %56 {offsets = [2, 0], sizes = [1, 32], strides = [1, 1]} : vector<3x32xf32> to vector<1x32xf32>
    %60 = tpu.concatenate %57, %58, %59 in 1 : vector<1x32xf32>, vector<1x32xf32>, vector<1x32xf32> -> vector<1x96xf32>
    %61 = arith.truncf %60 : vector<1x96xf32> to vector<1x96xbf16>
    %cst_20 = arith.constant dense<0.000000e+00> : vector<1x256xf32>
    %62 = tpu.matmul %61, %1, %cst_20 {dimension_numbers = #tpu.dot_dimension_numbers<[1], [0], [0], [1], [0, 0, 1, 1], [], []>} : vector<1x96xbf16>, vector<96x256xbf16>, vector<1x256xf32> -> vector<1x256xf32>
    %63 = arith.addf %62, %12 : vector<1x256xf32>
    %cst_21 = arith.constant 0.000000e+00 : f32
    %64 = vector.broadcast %cst_21 : f32 to vector<1x256xf32>
    %65 = arith.maximumf %63, %64 : vector<1x256xf32>
    %66 = arith.truncf %65 : vector<1x256xf32> to vector<1x256xbf16>
    %cst_22 = arith.constant dense<0.000000e+00> : vector<1x4xf32>
    %67 = tpu.matmul %66, %2, %cst_22 {dimension_numbers = #tpu.dot_dimension_numbers<[1], [1], [0], [0], [0, 0, 1, 0], [], []>} : vector<1x256xbf16>, vector<4x256xbf16>, vector<1x4xf32> -> vector<1x4xf32>
    %68 = arith.addf %67, %13 : vector<1x4xf32>
    %cst_23 = arith.constant 0.000000e+00 : f32
    %69 = vector.broadcast %cst_23 : f32 to vector<1x4xf32>
    %70 = arith.maximumf %68, %69 : vector<1x4xf32>
    %71 = arith.truncf %70 : vector<1x4xf32> to vector<1x4xbf16>
    %cst_24 = arith.constant dense<0.000000e+00> : vector<1x16xf32>
    %72 = tpu.matmul %71, %5, %cst_24 {dimension_numbers = #tpu.dot_dimension_numbers<[1], [0], [0], [1], [0, 0, 1, 1], [], []>} : vector<1x4xbf16>, vector<4x16xbf16>, vector<1x16xf32> -> vector<1x16xf32>
    %73 = arith.addf %72, %14 : vector<1x16xf32>
    %cst_25 = arith.constant 3.000000e+00 : f32
    %74 = vector.broadcast %cst_25 : f32 to vector<1x16xf32>
    %75 = arith.addf %73, %74 : vector<1x16xf32>
    %cst_26 = arith.constant 0.000000e+00 : f32
    %cst_27 = arith.constant 6.000000e+00 : f32
    %76 = vector.broadcast %cst_26 : f32 to vector<1x16xf32>
    %77 = arith.maximumf %76, %75 : vector<1x16xf32>
    %78 = vector.broadcast %cst_27 : f32 to vector<1x16xf32>
    %79 = arith.minimumf %78, %77 : vector<1x16xf32>
    %cst_28 = arith.constant 0.166666672 : f32
    %80 = vector.broadcast %cst_28 : f32 to vector<1x16xf32>
    %81 = arith.mulf %79, %80 : vector<1x16xf32>
    %82 = arith.extf %6 : vector<8x16xbf16> to vector<8x16xf32>
    %83 = vector.broadcast %81 : vector<1x16xf32> to vector<8x16xf32>
    %84 = arith.mulf %82, %83 : vector<8x16xf32>
    %85 = arith.truncf %84 : vector<8x16xf32> to vector<8x16xbf16>
    %86 = arith.truncf %45 : vector<16x36xf32> to vector<16x36xbf16>
    %cst_29 = arith.constant dense<0.000000e+00> : vector<8x36xf32>
    %87 = tpu.matmul %85, %86, %cst_29 {dimension_numbers = #tpu.dot_dimension_numbers<[1], [0], [0], [1], [0, 0, 1, 1], [], []>} : vector<8x16xbf16>, vector<16x36xbf16>, vector<8x36xf32> -> vector<8x36xf32>
    %88 = vector.broadcast %11 : vector<8x1xf32> to vector<8x36xf32>
    %89 = arith.addf %87, %88 : vector<8x36xf32>
    %cst_30 = arith.constant 3.000000e+00 : f32
    %90 = vector.broadcast %cst_30 : f32 to vector<8x36xf32>
    %91 = arith.addf %89, %90 : vector<8x36xf32>
    %cst_31 = arith.constant 0.000000e+00 : f32
    %cst_32 = arith.constant 6.000000e+00 : f32
    %92 = vector.broadcast %cst_31 : f32 to vector<8x36xf32>
    %93 = arith.maximumf %92, %91 : vector<8x36xf32>
    %94 = vector.broadcast %cst_32 : f32 to vector<8x36xf32>
    %95 = arith.minimumf %94, %93 : vector<8x36xf32>
    %96 = arith.mulf %89, %95 : vector<8x36xf32>
    %cst_33 = arith.constant 0.166666672 : f32
    %97 = vector.broadcast %cst_33 : f32 to vector<8x36xf32>
    %98 = arith.mulf %96, %97 : vector<8x36xf32>
    %99 = arith.addf %98, %0 : vector<8x36xf32>
    %c0_34 = arith.constant 0 : index
    %c0_35 = arith.constant 0 : index
    %100 = vector.load %arg4[%c0_34, %c0_35] : memref<8x36xf32, #tpu.memory_space<vmem>>, vector<8x36xf32>
    tpu.vector_store %arg4[%c0_34, %c0_35], %99 {strides = array<i32>} : memref<8x36xf32, #tpu.memory_space<vmem>>, vector<8x36xf32>,
    return
  }
  func.func @transform_0(%arg0: i32) -> (i32, i32) {
    %c0_i32 = arith.constant 0 : i32
    %c0_i32_0 = arith.constant 0 : i32
    %c0_i32_1 = arith.constant 0 : i32
    return %c0_i32, %c0_i32_0 : i32, i32
  }
  func.func @transform_1(%arg0: i32) -> (i32, i32) {
    %c0_i32 = arith.constant 0 : i32
    %c0_i32_0 = arith.constant 0 : i32
    %c0_i32_1 = arith.constant 0 : i32
    return %c0_i32, %c0_i32_0 : i32, i32
  }
  func.func @transform_2(%arg0: i32) -> (i32, i32) {
    %c0_i32 = arith.constant 0 : i32
    %c0_i32_0 = arith.constant 0 : i32
    %c0_i32_1 = arith.constant 0 : i32
    return %c0_i32, %c0_i32_0 : i32, i32
  }
  func.func @transform_3(%arg0: i32) -> (i32, i32) {
    %c0_i32 = arith.constant 0 : i32
    %c0_i32_0 = arith.constant 0 : i32
    %c0_i32_1 = arith.constant 0 : i32
    return %c0_i32, %c0_i32_0 : i32, i32
  }
}

</mosaic_0001>

<llo_original>
// kernel: block_forward.1
$region0: #{block_forward.1}
  #allocation0 [shape = 'u32[]', space=smem, size = 0x4, offset = 0x4, fixed_abs, tag = 'smem constant byte address 0x4 - core index']
  #allocation1 [shape = 'u32[144,128]{1,0:T(1,128)}', space=vmem, size = 0x12000, scoped, tag = 'internal scratch']
  %s0 = inlined_call_operand.hbm [shape: f32[8,36], index: 0, kind: input, shape index: {}]
  %s1 = inlined_call_operand.hbm [shape: bf16[176,256], index: 1, kind: input, shape index: {}]
  %s2 = inlined_call_operand.hbm [shape: f32[32,256], index: 2, kind: input, shape index: {}]
  %s3 = inlined_call_operand.hbm [shape: f32[8,36], index: 3, kind: output, shape index: {}]
  %s4 = sld [smem:[#allocation0]]
  $region34: #{block_forward.1} parent=0
    _
  %s6 = ssub.s32 1, %s4
  %s7 = scalar_select 0, %s6, %s4
  $region1: #{block_forward.1} parent=0
    #allocation2 [shape = 'u8[4096]{0}', space=vmem, size = 0x1000, scoped, tag = 'input window, operand 0, single buffered']
    #allocation3 [shape = 's32[1]{0}', space=sflag, size = 0x4, scoped, tag = 'scoped memory for block_forward.1']
    #allocation4 [shape = 's32[1]{0}', space=sflag, size = 0x4, scoped, tag = 'scoped memory for block_forward.1']
    #allocation5 [shape = 'u8[90112]{0}', space=vmem, size = 0x16000, scoped, tag = 'input window, operand 1, single buffered']
    #allocation6 [shape = 's32[1]{0}', space=sflag, size = 0x4, scoped, tag = 'scoped memory for block_forward.1']
    #allocation7 [shape = 'u8[32768]{0}', space=vmem, size = 0x8000, scoped, tag = 'input window, operand 2, single buffered']
    #allocation8 [shape = 'u8[4096]{0}', space=vmem, size = 0x1000, scoped, tag = 'output window, operand 0, single buffered']
    %8 = vsyncpa [#allocation3], 0
    %9 = vsyncpa [#allocation6], 0
    %10 = vsyncpa [#allocation4], 0
    // Predicated region
    $region2: #{block_forward.1} parent=1 // pred_check
      _
    $region3: #{block_forward.1} parent=1 // pred_check_branch
      %12 = sbr.rel (0) target = $region5
    $region4: #{block_forward.1} parent=1 // pred_region
      %s14 = ssub.s32 128, 128
      %15 = vsyncadd [#allocation3], %s14
      %s17 = sshll.u32 [#allocation2], 4
      %s18 = int_to_ptr.vmem [resolvable:$true] %s17
      %20 = dma.hbm_to_vmem [thread:$0]  %s0, 128, %s18, [#allocation3]
    $region5: #{block_forward.1} parent=1 // pred_fallthru
      _
    // Predicated region
    $region6: #{block_forward.1} parent=1 // pred_check
      _
    $region7: #{block_forward.1} parent=1 // pred_check_branch
      %22 = sbr.rel (0) target = $region9
    $region8: #{block_forward.1} parent=1 // pred_region
      %s24 = ssub.s32 2816, 2816
      %25 = vsyncadd [#allocation6], %s24
      %s26 = sshll.u32 [#allocation5], 4
      %s27 = int_to_ptr.vmem [resolvable:$true] %s26
      %32 = dma.hbm_to_vmem [thread:$0]  %s1, 2816, %s27, [#allocation6], 128, 128, 8
    $region9: #{block_forward.1} parent=1 // pred_fallthru
      _
    // Predicated region
    $region10: #{block_forward.1} parent=1 // pred_check
      _
    $region11: #{block_forward.1} parent=1 // pred_check_branch
      %34 = sbr.rel (0) target = $region13
    $region12: #{block_forward.1} parent=1 // pred_region
      %s36 = ssub.s32 1024, 1024
      %37 = vsyncadd [#allocation6], %s36
      %s38 = sshll.u32 [#allocation7], 4
      %s39 = int_to_ptr.vmem [resolvable:$true] %s38
      %44 = dma.hbm_to_vmem [thread:$0]  %s2, 1024, %s39, [#allocation6], 256, 256, 16
    $region13: #{block_forward.1} parent=1 // pred_fallthru
      _
    // Predicated region
    $region14: #{block_forward.1} parent=1 // pred_check
      _
    $region15: #{block_forward.1} parent=1 // pred_check_branch
      %46 = sbr.rel (0) target = $region17
    $region16: #{block_forward.1} parent=1 // pred_region
      %47 = dma.done [#allocation3], 128
    $region17: #{block_forward.1} parent=1 // pred_fallthru
      _
    // Predicated region
    $region18: #{block_forward.1} parent=1 // pred_check
      _
    $region19: #{block_forward.1} parent=1 // pred_check_branch
      %49 = sbr.rel (0) target = $region21
    $region20: #{block_forward.1} parent=1 // pred_region
      %50 = dma.done [#allocation6], 2816
    $region21: #{block_forward.1} parent=1 // pred_fallthru
      _
    // Predicated region
    $region22: #{block_forward.1} parent=1 // pred_check
      _
    $region23: #{block_forward.1} parent=1 // pred_check_branch
      %52 = sbr.rel (0) target = $region25
    $region24: #{block_forward.1} parent=1 // pred_region
      %53 = dma.done [#allocation6], 1024
    $region25: #{block_forward.1} parent=1 // pred_fallthru
      _
    %v55 = vld [vmem:[#allocation2] sm:$0xff]
    %v56 = vld [vmem:[#allocation5] sm:$0xff]
    %v57 = vld [vmem:[#allocation5 + $0x8] sm:$0xff]
    %v58 = vld [vmem:[#allocation5 + $0x10] sm:$0xff]
    %v59 = vld [vmem:[#allocation5 + $0x18] sm:$0xff]
    %v60 = vld [vmem:[#allocation5 + $0x20] sm:$0xff]
    %v61 = vld [vmem:[#allocation5 + $0x28] sm:$0xff]
    %v62 = vld [vmem:[#allocation5 + $0x30] sm:$0xff]
    %v63 = vld [vmem:[#allocation5 + $0x38] sm:$0xff]
    %v64 = vld [vmem:[#allocation5 + $0x40] sm:$0xff]
    %v65 = vld [vmem:[#allocation5 + $0x48] sm:$0xff]
    %v66 = vld [vmem:[#allocation5 + $0x50] sm:$0xff]
    %v67 = vld [vmem:[#allocation5 + $0x58] sm:$0xff]
    %v68 = vld [vmem:[#allocation5 + $0x60] sm:$0x33]
    %v69 = vld [vmem:[#allocation5 + $0x70] sm:$0xf]
    %v70 = vld [vmem:[#allocation5 + $0x78] sm:$0xf]
    %v71 = vld [vmem:[#allocation5 + $0x80] sm:$0x3]
    %v72 = vld [vmem:[#allocation5 + $0x90] sm:$0x3]
    %v73 = vld [vmem:[#allocation5 + $0xa0] sm:$0xf]
    %v74 = vld [vmem:[#allocation7] sm:$0xff]
    %v75 = vld [vmem:[#allocation7 + $0x10] sm:$0xff]
    %v76 = vld [vmem:[#allocation7 + $0x20] sm:$0xff]
    %s77 = scalar_lea.vmem [#allocation7], 48
    %v78 = vld [vmem:[%s77] ss:$8 sm:$0x3]
    %v79 = vld [vmem:[#allocation7 + $0x31] ss:$0 sm:$0xff]
    %v80 = vld [vmem:[#allocation7 + $0x32] ss:$0 sm:$0xff]
    %v81 = vpack.c.bf16 %v55, %v55
    %83 = vset.pattern.permute.xlu0 0
    %84 = vperm.xlu0 %83, %v74
    %v85 = vpop.permute.xlu0 %84
    %88 = vset.pattern.permute.xlu0 0
    %89 = vperm.xlu0 %88, %v75
    %v90 = vpop.permute.xlu0 %89
    %v94 = vunpack.c.l.b16 %v69
    %v95 = vunpack.c.l.b16 %v70
    %v96 = vpack.c.b16 %v95, %v94
    %vm97 = vcmask 64512
    %v99 = vsel %vm97, %v96, 0
    %vm101 = vcmask 1043456
    %v103 = vsel %vm101, %v81, 0
    %105 = vmatprep.subr.bf16.mxu0 0
    %106 = vmatpush1.bf16.msra.mxu0 0
    %107 = vmatprep.subr.bf16.mxu0 0
    %108 = vmatpush1.bf16.msra.mxu0 0
    %109 = vmatprep.subr.bf16.mxu0 0
    %110 = vmatpush1.bf16.msra.mxu0 0
    %111 = vmatprep.subr.bf16.mxu0 0
    %112 = vmatpush1.bf16.msra.mxu0 0
    %113 = vmatprep.subr.bf16.mxu0 0
    %114 = vmatpush1.bf16.msra.mxu0 0
    %115 = vmatprep.subr.bf16.mxu0 0
    %116 = vmatpush1.bf16.msra.mxu0 0
    %117 = vmatprep.subr.bf16.mxu0 0
    %118 = vmatpush1.bf16.msra.mxu0 0
    %119 = vmatprep.subr.bf16.mxu0 0
    %120 = vmatpush1.bf16.msra.mxu0 %v103
    %121 = vmatprep.subr.bf16.mxu0 0
    %122 = vmatpush2.bf16.msra.mxu0 0
    %123 = vmatprep.subr.bf16.mxu0 0
    %124 = vmatpush2.bf16.msra.mxu0 0
    %125 = vmatprep.subr.bf16.mxu0 0
    %126 = vmatpush2.bf16.msra.mxu0 0
    %127 = vmatprep.subr.bf16.mxu0 0
    %128 = vmatpush2.bf16.msra.mxu0 0
    %129 = vmatprep.subr.bf16.mxu0 0
    %130 = vmatpush2.bf16.msra.mxu0 0
    %131 = vmatprep.subr.bf16.mxu0 0
    %132 = vmatpush2.bf16.msra.mxu0 0
    %133 = vmatprep.subr.bf16.mxu0 0
    %134 = vmatpush2.bf16.msra.mxu0 0
    %135 = vmatprep.subr.bf16.mxu0 0
    %136 = vmatpush2.bf16.msra.mxu0 0
    %137 = vmatprep.mubr.bf16.mxu0 0
    %138 = vmatmul.mubr.bf16.gmra.mxu0 %v99
    %v139 = vpop.f32.mrf.mxu0
    %v140 = vadd.f32 %v85, %v139
    %v141 = vpop.f32.mrf.mxu0
    %v142 = vpop.f32.mrf.mxu0
    %v143 = vadd.f32 %v90, %v142
    %v144 = vpop.f32.mrf.mxu0
    %145 = vdwg.mxu0
    %v146 = vadd.f32 %v140, 3.0
    %v147 = vadd.f32 %v143, 3.0
    %v148 = vmax.f32 %v146, 0.0
    %v149 = vmax.f32 %v147, 0.0
    %v150 = vmin.f32 %v148, 6.0
    %v151 = vmin.f32 %v149, 6.0
    %v152 = vmul.f32 %v140, %v150
    %v153 = vmul.f32 %v143, %v151
    %v154 = vmul.f32 %v152, 0.16666667
    %v155 = vmul.f32 %v153, 0.16666667
    %158 = vrot.lane.b32.xlu0 %v154, 1
    %v159 = vpop.permute.xlu0 %158
    %160 = vrot.lane.b32.xlu0 %v155, 1
    %v161 = vpop.permute.xlu0 %160
    %vm164 = vcmask 7168
    %v165 = vsel %vm164, 0.0, %v159
    %v166 = vsel %vm164, 0.0, %v161
    %167 = vrot.lane.b32.xlu0 %v154, 127
    %v168 = vpop.permute.xlu0 %167
    %169 = vrot.lane.b32.xlu0 %v155, 127
    %v170 = vpop.permute.xlu0 %169
    %vm173 = vcmask 285696
    %v174 = vsel %vm173, %v168, 0.0
    %v175 = vsel %vm173, %v170, 0.0
    %176 = vset.pattern.permute.xlu0 1
    %177 = vperm.xlu0 %176, %v74
    %v178 = vpop.permute.xlu0 %177
    %180 = vset.pattern.permute.xlu0 1
    %181 = vperm.xlu0 %180, %v75
    %v182 = vpop.permute.xlu0 %181
    %v184 = vmul.f32 %v178, %v165
    %v185 = vmul.f32 %v182, %v166
    %186 = vset.pattern.permute.xlu0 2
    %187 = vperm.xlu0 %186, %v74
    %v188 = vpop.permute.xlu0 %187
    %190 = vset.pattern.permute.xlu0 2
    %191 = vperm.xlu0 %190, %v75
    %v192 = vpop.permute.xlu0 %191
    %v194 = vmul.f32 %v188, %v154
    %v195 = vmul.f32 %v192, %v155
    %v196 = vadd.f32 %v184, %v194
    %v197 = vadd.f32 %v185, %v195
    %198 = vset.pattern.permute.xlu0 3
    %199 = vperm.xlu0 %198, %v74
    %v200 = vpop.permute.xlu0 %199
    %202 = vset.pattern.permute.xlu0 3
    %203 = vperm.xlu0 %202, %v75
    %v204 = vpop.permute.xlu0 %203
    %v206 = vmul.f32 %v200, %v174
    %v207 = vmul.f32 %v204, %v175
    %v208 = vadd.f32 %v196, %v206
    %v209 = vadd.f32 %v197, %v207
    %210 = vset.pattern.permute.xlu0 4
    %211 = vperm.xlu0 %210, %v74
    %v212 = vpop.permute.xlu0 %211
    %214 = vset.pattern.permute.xlu0 4
    %215 = vperm.xlu0 %214, %v75
    %v216 = vpop.permute.xlu0 %215
    %v218 = vadd.f32 %v208, %v212
    %v219 = vadd.f32 %v209, %v216
    %v220 = vand.u32 2147483647, %v218
    %vm221 = vcmp.le.f32.partialorder %v220, 0.7853982
    %vm222 = vcmp.lt.s32.totalorder %v218, 0
    %v223 = vand.u32 %v218, 2139095040
    %v224 = vshrl.u32 %v223, 23
    %v225 = vsub.s32 %v224, 127
    %v226 = vand.u32 2147483647, %v218
    %v227 = vand.u32 %v226, 8388607
    %v228 = vor.u32 %v227, 8388608
    %v229 = vsub.s32 0, %v228
    %v230 = vadd.s32 %v225, 1
    %vm231 = vcmp.gt.s32.totalorder %v230, 0
    %v232 = vsel %vm231, %v230, 0
    %v233 = vshrl.u32 %v232, 5
    %v234 = vand.u32 %v232, 31
    %v235 = vsub.s32 32, %v234
    %v236 = vshrl.u32 683565275, %v235
    %v237 = vshll.u32 683565275, %v234
    %v238 = vshrl.u32 2475754826, %v235
    %v239 = vor.u32 %v237, %v238
    %v240 = vshll.u32 2475754826, %v234
    %v241 = vshrl.u32 2131351028, %v235
    %v242 = vor.u32 %v240, %v241
    %v243 = vshll.u32 2131351028, %v234
    %v244 = vshrl.u32 2102212464, %v235
    %v245 = vor.u32 %v243, %v244
    %v246 = vshll.u32 2102212464, %v234
    %v247 = vshrl.u32 920167782, %v235
    %v248 = vor.u32 %v246, %v247
    %v249 = vshll.u32 920167782, %v234
    %v250 = vshrl.u32 1326507024, %v235
    %v251 = vor.u32 %v249, %v250
    %vm252 = vcmp.lt.s32.totalorder %v233, 1
    %vm253 = vcmp.lt.s32.totalorder %v233, 2
    %vm254 = vcmp.lt.s32.totalorder %v233, 3
    %vm255 = vcmp.lt.s32.totalorder %v233, 4
    %v256 = vsel %vm252, %v236, %v239
    %v257 = vsel %vm255, %v245, 2102212464
    %v258 = vsel %vm254, %v242, %v257
    %v259 = vsel %vm253, %v256, %v258
    %v260 = vsel %vm252, %v239, %v242
    %v261 = vsel %vm255, %v248, 920167782
    %v262 = vsel %vm254, %v245, %v261
    %v263 = vsel %vm253, %v260, %v262
    %v264 = vsel %vm252, %v242, %v245
    %v265 = vsel %vm255, %v251, 1326507024
    %v266 = vsel %vm254, %v248, %v265
    %v267 = vsel %vm253, %v264, %v266
    %v268 = vshll.u32 %v228, 8
    %v269 = vmul.u32.u64.compose %v268, %v267
    %v270 = vextract.low.u32 %v269
    %v271 = vextract.high.u32 %v269
    %v272 = vmul.u32.u64.compose %v268, %v263
    %v273 = vextract.low.u32 %v272
    %v274 = vextract.high.u32 %v272
    %v275 = vmul.u32 %v268, %v259
    %v276 = vadd.s32 %v271, %v273
    %vm277 = vc.u32 %v271, %v273
    %v278 = vadd.s32 %v274, 1
    %v279 = vsel %vm277, %v278, %v274
    %v280 = vadd.s32 %v275, %v279
    %v281 = vadd.s32 %v280, 536870912
    %v282 = vshrl.u32 %v281, 30
    %v283 = vshll.u32 %v282, 30
    %v284 = vsub.s32 %v280, %v283
    %vm285 = vcmp.lt.s32.totalorder %v284, 0
    %v286 = vsub.s32 0, %v284
    %v287 = vsel %vm285, %v286, %v284
    %v288 = vclz %v287
    %v289 = vsub.s32 %v288, 2
    %vm290 = vcmp.gt.s32.totalorder 0, %v289
    %v291 = vsel %vm290, 0, %v289
    %v292 = vsub.s32 32, %v291
    %v293 = vshll.u32 %v284, %v291
    %v294 = vshrl.u32 %v276, %v292
    %v295 = vor.u32 %v293, %v294
    %v296 = vsub.s32 4294967266, %v291
    %v297 = vadd.s32 %v296, 127
    %v298 = vshll.u32 %v297, 23
    %v299 = vor.u32 4788187, %v298
    %v300 = vand.u32 2147483647, %v299
    %v302 = vcvt.s32.f32 %v295
    %v303 = vmul.f32 %v302, %v300
    %v304 = vxor.u32 %v303, 2147483648
    %v305 = vsel %vm222, %v304, %v303
    %v306 = vsub.s32 4, %v282
    %v307 = vsel %vm222, %v306, %v282
    %v308 = vsel %vm221, %v218, %v305
    %v309 = vsel %vm221, 0, %v307
    %v310 = vcosq.f32.pop %v308
    %v311 = vsinq.f32.pop %v308
    %vm312 = vweird.f32 %v218
    %v313 = vadd.s32 %v309, 3
    %v314 = vand.u32 %v313, 3
    %vm315 = vcmp.lt.s32.totalorder %v314, 2
    %vm316 = vcmp.eq.s32.totalorder %v314, 0
    %v317 = vxor.u32 %v311, 2147483648
    %v318 = vsel %vm316, %v310, %v317
    %vm319 = vcmp.eq.s32.totalorder %v314, 2
    %v320 = vxor.u32 %v310, 2147483648
    %v321 = vsel %vm319, %v320, %v311
    %v322 = vsel %vm315, %v318, %v321
    %v323 = vsel %vm312, nan, %v322
    %v324 = vand.u32 2147483647, %v219
    %vm325 = vcmp.le.f32.partialorder %v324, 0.7853982
    %vm326 = vcmp.lt.s32.totalorder %v219, 0
    %v327 = vand.u32 %v219, 2139095040
    %v328 = vshrl.u32 %v327, 23
    %v329 = vsub.s32 %v328, 127
    %v330 = vand.u32 2147483647, %v219
    %v331 = vand.u32 %v330, 8388607
    %v332 = vor.u32 %v331, 8388608
    %v333 = vsub.s32 0, %v332
    %v334 = vadd.s32 %v329, 1
    %vm335 = vcmp.gt.s32.totalorder %v334, 0
    %v336 = vsel %vm335, %v334, 0
    %v337 = vshrl.u32 %v336, 5
    %v338 = vand.u32 %v336, 31
    %v339 = vsub.s32 32, %v338
    %v340 = vshrl.u32 683565275, %v339
    %v341 = vshll.u32 683565275, %v338
    %v342 = vshrl.u32 2475754826, %v339
    %v343 = vor.u32 %v341, %v342
    %v344 = vshll.u32 2475754826, %v338
    %v345 = vshrl.u32 2131351028, %v339
    %v346 = vor.u32 %v344, %v345
    %v347 = vshll.u32 2131351028, %v338
    %v348 = vshrl.u32 2102212464, %v339
    %v349 = vor.u32 %v347, %v348
    %v350 = vshll.u32 2102212464, %v338
    %v351 = vshrl.u32 920167782, %v339
    %v352 = vor.u32 %v350, %v351
    %v353 = vshll.u32 920167782, %v338
    %v354 = vshrl.u32 1326507024, %v339
    %v355 = vor.u32 %v353, %v354
    %vm356 = vcmp.lt.s32.totalorder %v337, 1
    %vm357 = vcmp.lt.s32.totalorder %v337, 2
    %vm358 = vcmp.lt.s32.totalorder %v337, 3
    %vm359 = vcmp.lt.s32.totalorder %v337, 4
    %v360 = vsel %vm356, %v340, %v343
    %v361 = vsel %vm359, %v349, 2102212464
    %v362 = vsel %vm358, %v346, %v361
    %v363 = vsel %vm357, %v360, %v362
    %v364 = vsel %vm356, %v343, %v346
    %v365 = vsel %vm359, %v352, 920167782
    %v366 = vsel %vm358, %v349, %v365
    %v367 = vsel %vm357, %v364, %v366
    %v368 = vsel %vm356, %v346, %v349
    %v369 = vsel %vm359, %v355, 1326507024
    %v370 = vsel %vm358, %v352, %v369
    %v371 = vsel %vm357, %v368, %v370
    %v372 = vshll.u32 %v332, 8
    %v373 = vmul.u32.u64.compose %v372, %v371
    %v374 = vextract.low.u32 %v373
    %v375 = vextract.high.u32 %v373
    %v376 = vmul.u32.u64.compose %v372, %v367
    %v377 = vextract.low.u32 %v376
    %v378 = vextract.high.u32 %v376
    %v379 = vmul.u32 %v372, %v363
    %v380 = vadd.s32 %v375, %v377
    %vm381 = vc.u32 %v375, %v377
    %v382 = vadd.s32 %v378, 1
    %v383 = vsel %vm381, %v382, %v378
    %v384 = vadd.s32 %v379, %v383
    %v385 = vadd.s32 %v384, 536870912
    %v386 = vshrl.u32 %v385, 30
    %v387 = vshll.u32 %v386, 30
    %v388 = vsub.s32 %v384, %v387
    %vm389 = vcmp.lt.s32.totalorder %v388, 0
    %v390 = vsub.s32 0, %v388
    %v391 = vsel %vm389, %v390, %v388
    %v392 = vclz %v391
    %v393 = vsub.s32 %v392, 2
    %vm394 = vcmp.gt.s32.totalorder 0, %v393
    %v395 = vsel %vm394, 0, %v393
    %v396 = vsub.s32 32, %v395
    %v397 = vshll.u32 %v388, %v395
    %v398 = vshrl.u32 %v380, %v396
    %v399 = vor.u32 %v397, %v398
    %v400 = vsub.s32 4294967266, %v395
    %v401 = vadd.s32 %v400, 127
    %v402 = vshll.u32 %v401, 23
    %v403 = vor.u32 4788187, %v402
    %v404 = vand.u32 2147483647, %v403
    %v406 = vcvt.s32.f32 %v399
    %v407 = vmul.f32 %v406, %v404
    %v408 = vxor.u32 %v407, 2147483648
    %v409 = vsel %vm326, %v408, %v407
    %v410 = vsub.s32 4, %v386
    %v411 = vsel %vm326, %v410, %v386
    %v412 = vsel %vm325, %v219, %v409
    %v413 = vsel %vm325, 0, %v411
    %v414 = vcosq.f32.pop %v412
    %v415 = vsinq.f32.pop %v412
    %vm416 = vweird.f32 %v219
    %v417 = vadd.s32 %v413, 3
    %v418 = vand.u32 %v417, 3
    %vm419 = vcmp.lt.s32.totalorder %v418, 2
    %vm420 = vcmp.eq.s32.totalorder %v418, 0
    %v421 = vxor.u32 %v415, 2147483648
    %v422 = vsel %vm420, %v414, %v421
    %vm423 = vcmp.eq.s32.totalorder %v418, 2
    %v424 = vxor.u32 %v414, 2147483648
    %v425 = vsel %vm423, %v424, %v415
    %v426 = vsel %vm419, %v422, %v425
    %v427 = vsel %vm416, nan, %v426
    %v428 = vmul.f32 %v218, %v323
    %v429 = vmul.f32 %v219, %v427
    %v430 = vand.u32 2147483647, %v218
    %vm431 = vcmp.le.f32.partialorder %v430, 0.7853982
    %vm432 = vcmp.lt.s32.totalorder %v218, 0
    %v433 = vand.u32 %v218, 2139095040
    %v434 = vshrl.u32 %v433, 23
    %v435 = vsub.s32 %v434, 127
    %v436 = vand.u32 2147483647, %v218
    %v437 = vand.u32 %v436, 8388607
    %v438 = vor.u32 %v437, 8388608
    %v439 = vsub.s32 0, %v438
    %v440 = vadd.s32 %v435, 1
    %vm441 = vcmp.gt.s32.totalorder %v440, 0
    %v442 = vsel %vm441, %v440, 0
    %v443 = vshrl.u32 %v442, 5
    %v444 = vand.u32 %v442, 31
    %v445 = vsub.s32 32, %v444
    %v446 = vshrl.u32 683565275, %v445
    %v447 = vshll.u32 683565275, %v444
    %v448 = vshrl.u32 2475754826, %v445
    %v449 = vor.u32 %v447, %v448
    %v450 = vshll.u32 2475754826, %v444
    %v451 = vshrl.u32 2131351028, %v445
    %v452 = vor.u32 %v450, %v451
    %v453 = vshll.u32 2131351028, %v444
    %v454 = vshrl.u32 2102212464, %v445
    %v455 = vor.u32 %v453, %v454
    %v456 = vshll.u32 2102212464, %v444
    %v457 = vshrl.u32 920167782, %v445
    %v458 = vor.u32 %v456, %v457
    %v459 = vshll.u32 920167782, %v444
    %v460 = vshrl.u32 1326507024, %v445
    %v461 = vor.u32 %v459, %v460
    %vm462 = vcmp.lt.s32.totalorder %v443, 1
    %vm463 = vcmp.lt.s32.totalorder %v443, 2
    %vm464 = vcmp.lt.s32.totalorder %v443, 3
    %vm465 = vcmp.lt.s32.totalorder %v443, 4
    %v466 = vsel %vm462, %v446, %v449
    %v467 = vsel %vm465, %v455, 2102212464
    %v468 = vsel %vm464, %v452, %v467
    %v469 = vsel %vm463, %v466, %v468
    %v470 = vsel %vm462, %v449, %v452
    %v471 = vsel %vm465, %v458, 920167782
    %v472 = vsel %vm464, %v455, %v471
    %v473 = vsel %vm463, %v470, %v472
    %v474 = vsel %vm462, %v452, %v455
    %v475 = vsel %vm465, %v461, 1326507024
    %v476 = vsel %vm464, %v458, %v475
    %v477 = vsel %vm463, %v474, %v476
    %v478 = vshll.u32 %v438, 8
    %v479 = vmul.u32.u64.compose %v478, %v477
    %v480 = vextract.low.u32 %v479
    %v481 = vextract.high.u32 %v479
    %v482 = vmul.u32.u64.compose %v478, %v473
    %v483 = vextract.low.u32 %v482
    %v484 = vextract.high.u32 %v482
    %v485 = vmul.u32 %v478, %v469
    %v486 = vadd.s32 %v481, %v483
    %vm487 = vc.u32 %v481, %v483
    %v488 = vadd.s32 %v484, 1
    %v489 = vsel %vm487, %v488, %v484
    %v490 = vadd.s32 %v485, %v489
    %v491 = vadd.s32 %v490, 536870912
    %v492 = vshrl.u32 %v491, 30
    %v493 = vshll.u32 %v492, 30
    %v494 = vsub.s32 %v490, %v493
    %vm495 = vcmp.lt.s32.totalorder %v494, 0
    %v496 = vsub.s32 0, %v494
    %v497 = vsel %vm495, %v496, %v494
    %v498 = vclz %v497
    %v499 = vsub.s32 %v498, 2
    %vm500 = vcmp.gt.s32.totalorder 0, %v499
    %v501 = vsel %vm500, 0, %v499
    %v502 = vsub.s32 32, %v501
    %v503 = vshll.u32 %v494, %v501
    %v504 = vshrl.u32 %v486, %v502
    %v505 = vor.u32 %v503, %v504
    %v506 = vsub.s32 4294967266, %v501
    %v507 = vadd.s32 %v506, 127
    %v508 = vshll.u32 %v507, 23
    %v509 = vor.u32 4788187, %v508
    %v510 = vand.u32 2147483647, %v509
    %v512 = vcvt.s32.f32 %v505
    %v513 = vmul.f32 %v512, %v510
    %v514 = vxor.u32 %v513, 2147483648
    %v515 = vsel %vm432, %v514, %v513
    %v516 = vsub.s32 4, %v492
    %v517 = vsel %vm432, %v516, %v492
    %v518 = vsel %vm431, %v218, %v515
    %v519 = vsel %vm431, 0, %v517
    %v520 = vcosq.f32.pop %v518
    %v521 = vsinq.f32.pop %v518
    %vm522 = vweird.f32 %v218
    %v523 = vand.u32 %v519, 3
    %vm524 = vcmp.lt.s32.totalorder %v523, 2
    %vm525 = vcmp.eq.s32.totalorder %v523, 0
    %v526 = vxor.u32 %v521, 2147483648
    %v527 = vsel %vm525, %v520, %v526
    %vm528 = vcmp.eq.s32.totalorder %v523, 2
    %v529 = vxor.u32 %v520, 2147483648
    %v530 = vsel %vm528, %v529, %v521
    %v531 = vsel %vm524, %v527, %v530
    %v532 = vsel %vm522, nan, %v531
    %v533 = vand.u32 2147483647, %v219
    %vm534 = vcmp.le.f32.partialorder %v533, 0.7853982
    %vm535 = vcmp.lt.s32.totalorder %v219, 0
    %v536 = vand.u32 %v219, 2139095040
    %v537 = vshrl.u32 %v536, 23
    %v538 = vsub.s32 %v537, 127
    %v539 = vand.u32 2147483647, %v219
    %v540 = vand.u32 %v539, 8388607
    %v541 = vor.u32 %v540, 8388608
    %v542 = vsub.s32 0, %v541
    %v543 = vadd.s32 %v538, 1
    %vm544 = vcmp.gt.s32.totalorder %v543, 0
    %v545 = vsel %vm544, %v543, 0
    %v546 = vshrl.u32 %v545, 5
    %v547 = vand.u32 %v545, 31
    %v548 = vsub.s32 32, %v547
    %v549 = vshrl.u32 683565275, %v548
    %v550 = vshll.u32 683565275, %v547
    %v551 = vshrl.u32 2475754826, %v548
    %v552 = vor.u32 %v550, %v551
    %v553 = vshll.u32 2475754826, %v547
    %v554 = vshrl.u32 2131351028, %v548
    %v555 = vor.u32 %v553, %v554
    %v556 = vshll.u32 2131351028, %v547
    %v557 = vshrl.u32 2102212464, %v548
    %v558 = vor.u32 %v556, %v557
    %v559 = vshll.u32 2102212464, %v547
    %v560 = vshrl.u32 920167782, %v548
    %v561 = vor.u32 %v559, %v560
    %v562 = vshll.u32 920167782, %v547
    %v563 = vshrl.u32 1326507024, %v548
    %v564 = vor.u32 %v562, %v563
    %vm565 = vcmp.lt.s32.totalorder %v546, 1
    %vm566 = vcmp.lt.s32.totalorder %v546, 2
    %vm567 = vcmp.lt.s32.totalorder %v546, 3
    %vm568 = vcmp.lt.s32.totalorder %v546, 4
    %v569 = vsel %vm565, %v549, %v552
    %v570 = vsel %vm568, %v558, 2102212464
    %v571 = vsel %vm567, %v555, %v570
    %v572 = vsel %vm566, %v569, %v571
    %v573 = vsel %vm565, %v552, %v555
    %v574 = vsel %vm568, %v561, 920167782
    %v575 = vsel %vm567, %v558, %v574
    %v576 = vsel %vm566, %v573, %v575
    %v577 = vsel %vm565, %v555, %v558
    %v578 = vsel %vm568, %v564, 1326507024
    %v579 = vsel %vm567, %v561, %v578
    %v580 = vsel %vm566, %v577, %v579
    %v581 = vshll.u32 %v541, 8
    %v582 = vmul.u32.u64.compose %v581, %v580
    %v583 = vextract.low.u32 %v582
    %v584 = vextract.high.u32 %v582
    %v585 = vmul.u32.u64.compose %v581, %v576
    %v586 = vextract.low.u32 %v585
    %v587 = vextract.high.u32 %v585
    %v588 = vmul.u32 %v581, %v572
    %v589 = vadd.s32 %v584, %v586
    %vm590 = vc.u32 %v584, %v586
    %v591 = vadd.s32 %v587, 1
    %v592 = vsel %vm590, %v591, %v587
    %v593 = vadd.s32 %v588, %v592
    %v594 = vadd.s32 %v593, 536870912
    %v595 = vshrl.u32 %v594, 30
    %v596 = vshll.u32 %v595, 30
    %v597 = vsub.s32 %v593, %v596
    %vm598 = vcmp.lt.s32.totalorder %v597, 0
    %v599 = vsub.s32 0, %v597
    %v600 = vsel %vm598, %v599, %v597
    %v601 = vclz %v600
    %v602 = vsub.s32 %v601, 2
    %vm603 = vcmp.gt.s32.totalorder 0, %v602
    %v604 = vsel %vm603, 0, %v602
    %v605 = vsub.s32 32, %v604
    %v606 = vshll.u32 %v597, %v604
    %v607 = vshrl.u32 %v589, %v605
    %v608 = vor.u32 %v606, %v607
    %v609 = vsub.s32 4294967266, %v604
    %v610 = vadd.s32 %v609, 127
    %v611 = vshll.u32 %v610, 23
    %v612 = vor.u32 4788187, %v611
    %v613 = vand.u32 2147483647, %v612
    %v615 = vcvt.s32.f32 %v608
    %v616 = vmul.f32 %v615, %v613
    %v617 = vxor.u32 %v616, 2147483648
    %v618 = vsel %vm535, %v617, %v616
    %v619 = vsub.s32 4, %v595
    %v620 = vsel %vm535, %v619, %v595
    %v621 = vsel %vm534, %v219, %v618
    %v622 = vsel %vm534, 0, %v620
    %v623 = vcosq.f32.pop %v621
    %v624 = vsinq.f32.pop %v621
    %vm625 = vweird.f32 %v219
    %v626 = vand.u32 %v622, 3
    %vm627 = vcmp.lt.s32.totalorder %v626, 2
    %vm628 = vcmp.eq.s32.totalorder %v626, 0
    %v629 = vxor.u32 %v624, 2147483648
    %v630 = vsel %vm628, %v623, %v629
    %vm631 = vcmp.eq.s32.totalorder %v626, 2
    %v632 = vxor.u32 %v623, 2147483648
    %v633 = vsel %vm631, %v632, %v624
    %v634 = vsel %vm627, %v630, %v633
    %v635 = vsel %vm625, nan, %v634
    %v636 = vmul.f32 %v218, %v532
    %v637 = vmul.f32 %v219, %v635
    %v638 = vpack.c.bf16 %v636, %v428
    %v639 = vpack.c.bf16 %v637, %v429
    %vm640 = vcmask 293888
    %v642 = vsel %vm640, %v71, 0
    %v645 = vsel %vm640, %v638, 0
    %v648 = vsel %vm640, %v639, 0
    %650 = vmatprep.subr.bf16.mxu0 0
    %651 = vmatpush1.bf16.xpose.msra.mxu0 0
    %652 = vmatprep.subr.bf16.mxu0 0
    %653 = vmatpush1.bf16.xpose.msra.mxu0 0
    %654 = vmatprep.subr.bf16.mxu0 0
    %655 = vmatpush1.bf16.xpose.msra.mxu0 0
    %656 = vmatprep.subr.bf16.mxu0 0
    %657 = vmatpush1.bf16.xpose.msra.mxu0 0
    %658 = vmatprep.subr.bf16.mxu0 0
    %659 = vmatpush1.bf16.xpose.msra.mxu0 0
    %660 = vmatprep.subr.bf16.mxu0 0
    %661 = vmatpush1.bf16.xpose.msra.mxu0 0
    %662 = vmatprep.subr.bf16.mxu0 0
    %663 = vmatpush1.bf16.xpose.msra.mxu0 %v648
    %664 = vmatprep.subr.bf16.mxu0 0
    %665 = vmatpush1.bf16.xpose.msra.mxu0 %v645
    %666 = vmatprep.subr.bf16.mxu0 0
    %667 = vmatpush2.bf16.xpose.msra.mxu0 0
    %668 = vmatprep.subr.bf16.mxu0 0
    %669 = vmatpush2.bf16.xpose.msra.mxu0 0
    %670 = vmatprep.subr.bf16.mxu0 0
    %671 = vmatpush2.bf16.xpose.msra.mxu0 0
    %672 = vmatprep.subr.bf16.mxu0 0
    %673 = vmatpush2.bf16.xpose.msra.mxu0 0
    %674 = vmatprep.subr.bf16.mxu0 0
    %675 = vmatpush2.bf16.xpose.msra.mxu0 0
    %676 = vmatprep.subr.bf16.mxu0 0
    %677 = vmatpush2.bf16.xpose.msra.mxu0 0
    %678 = vmatprep.subr.bf16.mxu0 0
    %679 = vmatpush2.bf16.xpose.msra.mxu0 0
    %680 = vmatprep.subr.bf16.mxu0 0
    %681 = vmatpush2.bf16.xpose.msra.mxu0 0
    %682 = vmatprep.mubr.bf16.mxu0 0
    %683 = vmatmul.mubr.bf16.gmra.mxu0 %v642
    %v684 = vpop.f32.mrf.mxu0
    %v685 = vadd.f32 0.0, %v684
    %v686 = vpop.f32.mrf.mxu0
    %v687 = vpop.f32.mrf.mxu0
    %v688 = vpop.f32.mrf.mxu0
    %689 = vdwg.mxu0
    %v691 = vrot.slane %v685, 1
    %692 = vrot.lane.b32.xlu0 %v691, 32
    %v693 = vpop.permute.xlu0 %692
    %v695 = vrot.slane %v685, 2
    %696 = vrot.lane.b32.xlu0 %v695, 64
    %v697 = vpop.permute.xlu0 %696
    %vm699 = vcmask 261120
    %v700 = vsel %vm699, %v685, %v693
    %vm701 = vcmask 523264
    %v702 = vsel %vm701, %v700, %v697
    %v703 = vpack.c.bf16 %v702, %v702
    %v716 = vunpack.c.l.b16 %v56
    %v717 = vunpack.c.h.b16 %v56
    %v718 = vunpack.c.l.b16 %v57
    %v719 = vunpack.c.h.b16 %v57
    %v720 = vunpack.c.l.b16 %v58
    %v721 = vunpack.c.h.b16 %v58
    %v722 = vunpack.c.l.b16 %v59
    %v723 = vunpack.c.h.b16 %v59
    %v724 = vunpack.c.l.b16 %v60
    %v725 = vunpack.c.h.b16 %v60
    %v726 = vunpack.c.l.b16 %v61
    %v727 = vunpack.c.h.b16 %v61
    %v728 = vunpack.c.l.b16 %v62
    %v729 = vunpack.c.h.b16 %v62
    %v730 = vunpack.c.l.b16 %v63
    %v731 = vunpack.c.h.b16 %v63
    %v732 = vunpack.c.l.b16 %v64
    %v733 = vunpack.c.h.b16 %v64
    %v734 = vunpack.c.l.b16 %v65
    %v735 = vunpack.c.h.b16 %v65
    %v736 = vunpack.c.l.b16 %v66
    %v737 = vunpack.c.h.b16 %v66
    %v738 = vunpack.c.l.b16 %v67
    %v739 = vunpack.c.h.b16 %v67
    %v740 = vpack.c.b16 %v718, %v716
    %v741 = vpack.c.b16 %v719, %v717
    %v742 = vpack.c.b16 %v722, %v720
    %v743 = vpack.c.b16 %v723, %v721
    %v744 = vpack.c.b16 %v726, %v724
    %v745 = vpack.c.b16 %v727, %v725
    %v746 = vpack.c.b16 %v730, %v728
    %v747 = vpack.c.b16 %v731, %v729
    %v748 = vpack.c.b16 %v734, %v732
    %v749 = vpack.c.b16 %v735, %v733
    %v750 = vpack.c.b16 %v738, %v736
    %v751 = vpack.c.b16 %v739, %v737
    %v765 = vlaneseq
    %v766 = vshrl.u32 %v765, 7
    %v767 = vsub.s32 0, %v766
    %v768 = vrot.slane %v78, %v767
    %v769 = vlaneseq
    %v770 = vshrl.u32 %v769, 7
    %v771 = vsub.s32 1, %v770
    %v772 = vrot.slane %v78, %v771
    %vm775 = vcmask 785408
    %v777 = vsel %vm775, %v703, 0
    %779 = vmatprep.subr.bf16.mxu0 0
    %780 = vmatpush1.bf16.msra.mxu0 0
    %781 = vmatprep.subr.bf16.mxu0 0
    %782 = vmatpush1.bf16.msra.mxu0 0
    %783 = vmatprep.subr.bf16.mxu0 %v751
    %784 = vmatpush1.bf16.msra.mxu0 %v750
    %785 = vmatprep.subr.bf16.mxu0 %v749
    %786 = vmatpush1.bf16.msra.mxu0 %v748
    %787 = vmatprep.subr.bf16.mxu0 %v747
    %788 = vmatpush1.bf16.msra.mxu0 %v746
    %789 = vmatprep.subr.bf16.mxu0 %v745
    %790 = vmatpush1.bf16.msra.mxu0 %v744
    %791 = vmatprep.subr.bf16.mxu0 %v743
    %792 = vmatpush1.bf16.msra.mxu0 %v742
    %793 = vmatprep.subr.bf16.mxu0 %v741
    %794 = vmatpush1.bf16.msra.mxu0 %v740
    %795 = vmatprep.subr.bf16.mxu0 0
    %796 = vmatpush2.bf16.msra.mxu0 0
    %797 = vmatprep.subr.bf16.mxu0 0
    %798 = vmatpush2.bf16.msra.mxu0 0
    %799 = vmatprep.subr.bf16.mxu0 0
    %800 = vmatpush2.bf16.msra.mxu0 0
    %801 = vmatprep.subr.bf16.mxu0 0
    %802 = vmatpush2.bf16.msra.mxu0 0
    %803 = vmatprep.subr.bf16.mxu0 0
    %804 = vmatpush2.bf16.msra.mxu0 0
    %805 = vmatprep.subr.bf16.mxu0 0
    %806 = vmatpush2.bf16.msra.mxu0 0
    %807 = vmatprep.subr.bf16.mxu0 0
    %808 = vmatpush2.bf16.msra.mxu0 0
    %809 = vmatprep.subr.bf16.mxu0 0
    %810 = vmatpush2.bf16.msra.mxu0 0
    %811 = vmatprep.mubr.bf16.mxu0 0
    %812 = vmatmul.mubr.bf16.gmra.mxu0 %v777
    %v813 = vpop.f32.mrf.mxu0
    %v814 = vadd.f32 %v768, %v813
    %v815 = vpop.f32.mrf.mxu0
    %v816 = vadd.f32 %v772, %v815
    %v817 = vpop.f32.mrf.mxu0
    %v818 = vpop.f32.mrf.mxu0
    %819 = vdwg.mxu0
    %v820 = vmax.f32 %v814, 0.0
    %v821 = vmax.f32 %v816, 0.0
    %v822 = vpack.c.bf16 %v820, %v820
    %v823 = vpack.c.bf16 %v821, %v821
    %v825 = vunpack.c.l.b16 %v68
    %v826 = vunpack.c.h.b16 %v68
    %v827 = vpack.c.b16 %v825, %v825
    %v828 = vpack.c.b16 %v826, %v826
    %831 = vmatprep.subr.bf16.mxu0 0
    %832 = vmatpush1.bf16.xpose.msra.mxu0 0
    %833 = vmatprep.subr.bf16.mxu0 0
    %834 = vmatpush1.bf16.xpose.msra.mxu0 0
    %835 = vmatprep.subr.bf16.mxu0 0
    %836 = vmatpush1.bf16.xpose.msra.mxu0 0
    %837 = vmatprep.subr.bf16.mxu0 0
    %838 = vmatpush1.bf16.xpose.msra.mxu0 0
    %839 = vmatprep.subr.bf16.mxu0 0
    %840 = vmatpush1.bf16.xpose.msra.mxu0 0
    %841 = vmatprep.subr.bf16.mxu0 0
    %842 = vmatpush1.bf16.xpose.msra.mxu0 0
    %843 = vmatprep.subr.bf16.mxu0 0
    %844 = vmatpush1.bf16.xpose.msra.mxu0 0
    %845 = vmatprep.subr.bf16.mxu0 %v828
    %846 = vmatpush1.bf16.xpose.msra.mxu0 %v827
    %847 = vmatprep.subr.bf16.mxu0 0
    %848 = vmatpush2.bf16.xpose.msra.mxu0 0
    %849 = vmatprep.subr.bf16.mxu0 0
    %850 = vmatpush2.bf16.xpose.msra.mxu0 0
    %851 = vmatprep.subr.bf16.mxu0 0
    %852 = vmatpush2.bf16.xpose.msra.mxu0 0
    %853 = vmatprep.subr.bf16.mxu0 0
    %854 = vmatpush2.bf16.xpose.msra.mxu0 0
    %855 = vmatprep.subr.bf16.mxu0 0
    %856 = vmatpush2.bf16.xpose.msra.mxu0 0
    %857 = vmatprep.subr.bf16.mxu0 0
    %858 = vmatpush2.bf16.xpose.msra.mxu0 0
    %859 = vmatprep.subr.bf16.mxu0 0
    %860 = vmatpush2.bf16.xpose.msra.mxu0 0
    %861 = vmatprep.subr.bf16.mxu0 0
    %862 = vmatpush2.bf16.xpose.msra.mxu0 0
    %863 = vmatprep.mubr.bf16.mxu0 %v823
    %864 = vmatmul.mubr.bf16.gmra.mxu0 %v822
    %v865 = vpop.f32.mrf.mxu0
    %v866 = vadd.f32 %v79, %v865
    %v867 = vpop.f32.mrf.mxu0
    %v868 = vpop.f32.mrf.mxu0
    %v869 = vpop.f32.mrf.mxu0
    %870 = vdwg.mxu0
    %v871 = vmax.f32 %v866, 0.0
    %v872 = vpack.c.bf16 %v871, %v871
    %vm873 = vcmask 31744
    %v875 = vsel %vm873, %v872, 0
    %vm877 = vcmask 1041408
    %v879 = vsel %vm877, %v72, 0
    %881 = vmatprep.subr.bf16.mxu0 0
    %882 = vmatpush1.bf16.msra.mxu0 0
    %883 = vmatprep.subr.bf16.mxu0 0
    %884 = vmatpush1.bf16.msra.mxu0 0
    %885 = vmatprep.subr.bf16.mxu0 0
    %886 = vmatpush1.bf16.msra.mxu0 0
    %887 = vmatprep.subr.bf16.mxu0 0
    %888 = vmatpush1.bf16.msra.mxu0 0
    %889 = vmatprep.subr.bf16.mxu0 0
    %890 = vmatpush1.bf16.msra.mxu0 0
    %891 = vmatprep.subr.bf16.mxu0 0
    %892 = vmatpush1.bf16.msra.mxu0 0
    %893 = vmatprep.subr.bf16.mxu0 0
    %894 = vmatpush1.bf16.msra.mxu0 0
    %895 = vmatprep.subr.bf16.mxu0 0
    %896 = vmatpush1.bf16.msra.mxu0 %v879
    %897 = vmatprep.subr.bf16.mxu0 0
    %898 = vmatpush2.bf16.msra.mxu0 0
    %899 = vmatprep.subr.bf16.mxu0 0
    %900 = vmatpush2.bf16.msra.mxu0 0
    %901 = vmatprep.subr.bf16.mxu0 0
    %902 = vmatpush2.bf16.msra.mxu0 0
    %903 = vmatprep.subr.bf16.mxu0 0
    %904 = vmatpush2.bf16.msra.mxu0 0
    %905 = vmatprep.subr.bf16.mxu0 0
    %906 = vmatpush2.bf16.msra.mxu0 0
    %907 = vmatprep.subr.bf16.mxu0 0
    %908 = vmatpush2.bf16.msra.mxu0 0
    %909 = vmatprep.subr.bf16.mxu0 0
    %910 = vmatpush2.bf16.msra.mxu0 0
    %911 = vmatprep.subr.bf16.mxu0 0
    %912 = vmatpush2.bf16.msra.mxu0 0
    %913 = vmatprep.mubr.bf16.mxu0 0
    %914 = vmatmul.mubr.bf16.gmra.mxu0 %v875
    %v915 = vpop.f32.mrf.mxu0
    %v916 = vadd.f32 %v80, %v915
    %v917 = vpop.f32.mrf.mxu0
    %v918 = vpop.f32.mrf.mxu0
    %v919 = vpop.f32.mrf.mxu0
    %920 = vdwg.mxu0
    %v921 = vadd.f32 %v916, 3.0
    %v922 = vmax.f32 %v921, 0.0
    %v923 = vmin.f32 %v922, 6.0
    %v924 = vmul.f32 %v923, 0.16666667
    %v925 = vunpack.c.l.bf16 %v73
    %v926 = vlaneseq
    %v927 = vshrl.u32 %v926, 7
    %v928 = vsub.s32 0, %v927
    %v929 = vrot.slane %v924, %v928
    %v930 = vmul.f32 %v925, %v929
    %v931 = vpack.c.bf16 %v930, %v930
    %v932 = vpack.c.bf16 %v219, %v218
    %934 = vset.pattern.permute.xlu0 0
    %935 = vperm.xlu0 %934, %v76
    %v936 = vpop.permute.xlu0 %935
    %vm938 = vcmask 130048
    %v940 = vsel %vm938, %v931, 0
    %942 = vmatprep.subr.bf16.mxu0 0
    %943 = vmatpush1.bf16.msra.mxu0 0
    %944 = vmatprep.subr.bf16.mxu0 0
    %945 = vmatpush1.bf16.msra.mxu0 0
    %946 = vmatprep.subr.bf16.mxu0 0
    %947 = vmatpush1.bf16.msra.mxu0 0
    %948 = vmatprep.subr.bf16.mxu0 0
    %949 = vmatpush1.bf16.msra.mxu0 0
    %950 = vmatprep.subr.bf16.mxu0 0
    %951 = vmatpush1.bf16.msra.mxu0 0
    %952 = vmatprep.subr.bf16.mxu0 0
    %953 = vmatpush1.bf16.msra.mxu0 0
    %954 = vmatprep.subr.bf16.mxu0 0
    %955 = vmatpush1.bf16.msra.mxu0 0
    %956 = vmatprep.subr.bf16.mxu0 0
    %957 = vmatpush1.bf16.msra.mxu0 %v932
    %958 = vmatprep.subr.bf16.mxu0 0
    %959 = vmatpush2.bf16.msra.mxu0 0
    %960 = vmatprep.subr.bf16.mxu0 0
    %961 = vmatpush2.bf16.msra.mxu0 0
    %962 = vmatprep.subr.bf16.mxu0 0
    %963 = vmatpush2.bf16.msra.mxu0 0
    %964 = vmatprep.subr.bf16.mxu0 0
    %965 = vmatpush2.bf16.msra.mxu0 0
    %966 = vmatprep.subr.bf16.mxu0 0
    %967 = vmatpush2.bf16.msra.mxu0 0
    %968 = vmatprep.subr.bf16.mxu0 0
    %969 = vmatpush2.bf16.msra.mxu0 0
    %970 = vmatprep.subr.bf16.mxu0 0
    %971 = vmatpush2.bf16.msra.mxu0 0
    %972 = vmatprep.subr.bf16.mxu0 0
    %973 = vmatpush2.bf16.msra.mxu0 0
    %974 = vmatprep.mubr.bf16.mxu0 0
    %975 = vmatmul.mubr.bf16.gmra.mxu0 %v940
    %v976 = vpop.f32.mrf.mxu0
    %v977 = vadd.f32 %v936, %v976
    %v978 = vpop.f32.mrf.mxu0
    %v979 = vpop.f32.mrf.mxu0
    %v980 = vpop.f32.mrf.mxu0
    %981 = vdwg.mxu0
    %v982 = vadd.f32 %v977, 3.0
    %v983 = vmax.f32 %v982, 0.0
    %v984 = vmin.f32 %v983, 6.0
    %v985 = vmul.f32 %v977, %v984
    %v986 = vmul.f32 %v985, 0.16666667
    %v987 = vadd.f32 %v986, %v55
    %988 = vst.msk [vmem:[#allocation8] sm:$0xff] %vm640, %v987
    // Predicated region
    $region26: #{block_forward.1} parent=1 // pred_check
      _
    $region27: #{block_forward.1} parent=1 // pred_check_branch
      %990 = sbr.rel (0) target = $region29
    $region28: #{block_forward.1} parent=1 // pred_region
      %s992 = ssub.s32 128, 128
      %993 = vsyncadd [#allocation4], %s992
      %s995 = sshll.u32 [#allocation8], 4
      %s996 = int_to_ptr.vmem [resolvable:$true] %s995
      %998 = dma.vmem_to_hbm [thread:$0]  %s996, 128, %s3, [#allocation4]
    $region29: #{block_forward.1} parent=1 // pred_fallthru
      _
    // Predicated region
    $region30: #{block_forward.1} parent=1 // pred_check
      _
    $region31: #{block_forward.1} parent=1 // pred_check_branch
      %1000 = sbr.rel (0) target = $region33
    $region32: #{block_forward.1} parent=1 // pred_region
      %1001 = dma.done [#allocation4], 128
    $region33: #{block_forward.1} parent=1 // pred_fallthru
      _
    %1002 = vsyncpa [#allocation3], 1
    %1003 = vsyncpa [#allocation6], 1
    %1004 = vsyncpa [#allocation4], 1

</llo_original>
